<compile_context>
chip_gen: v6e
topology: v6e:2x2x1
jax: 0.10.0
libtpu: 0.0.40
codegen_flags: <defaults>
</compile_context>

<pallas_src>
import functools
import math

import jax
import jax.numpy as jnp
from jax import lax
from jax.experimental import pallas as pl
from jax.experimental.pallas import tpu as pltpu

SUBLANES = 8
LANES = 128
CHUNK_ROWS = 32  # rows of membrane/sum_spikes state held in vregs across T


def _if_act_kernel(thr_ref, x_ref, out_ref, *, chunk_rows):
    """thr_ref: (1,1) f32 SMEM.  x_ref/out_ref: (T, rb, 128) VMEM blocks."""
    T, rb, n_lanes = x_ref.shape
    thr = thr_ref[0, 0]
    half_thr = thr * jnp.float32(0.5)

    def run_rows(r0, n_rows):
        membrane = jnp.full((n_rows, n_lanes), half_thr, jnp.float32)
        sum_spikes = jnp.zeros((n_rows, n_lanes), jnp.float32)
        for dt in range(T):  # T is small & static -> unrolled
            membrane = membrane + x_ref[dt, pl.ds(r0, n_rows), :].astype(jnp.float32)
            spikes_b = membrane >= thr
            membrane = jnp.where(spikes_b, membrane - thr, membrane)
            sum_spikes = jnp.where(spikes_b, sum_spikes + 1.0, sum_spikes)
            # self.sign == True branch of the reference.
            inhibit_b = jnp.logical_and(membrane <= -0.001, sum_spikes > 0.0)
            membrane = jnp.where(inhibit_b, membrane + thr, membrane)
            sum_spikes = jnp.where(inhibit_b, sum_spikes - 1.0, sum_spikes)
            # spike_train[:, dt] = (spikes - inhibit) * threshold
            # (spikes and inhibit are mutually exclusive within one timestep).
            out = jnp.where(spikes_b, thr,
                            jnp.where(inhibit_b, -thr, jnp.float32(0.0)))
            out_ref[dt, pl.ds(r0, n_rows), :] = out.astype(out_ref.dtype)

    n_full = rb // chunk_rows
    rem = rb - n_full * chunk_rows

    if n_full > 0:
        def chunk_body(c, carry):
            run_rows(pl.multiple_of(c * chunk_rows, chunk_rows), chunk_rows)
            return carry
        lax.fori_loop(0, n_full, chunk_body, 0, unroll=2)
    if rem > 0:  # static tail (rb not a multiple of chunk_rows)
        run_rows(n_full * chunk_rows, rem)


def if_act(x, act_alpha=1.0):
    """x: [B, T, ...] floating.  act_alpha: python float or traced scalar.
    Returns the spike train with the same shape/dtype as x."""
    x = jnp.asarray(x)
    if not jnp.issubdtype(x.dtype, jnp.floating):
        x = x.astype(jnp.float32)
    out_dtype = x.dtype
    itemsize = jnp.dtype(x.dtype).itemsize

    B, T = int(x.shape[0]), int(x.shape[1])
    rest = tuple(int(d) for d in x.shape[2:])
    M = math.prod(rest) if rest else 1

    # ---- Present x as [B, T, rows, 128] with as little copying as possible.
    if M % LANES == 0:
        rows = M // LANES
        x_tiled = x.reshape(B, T, rows, LANES)  # free reshape, zero copies
        lane_padded = False
        M_pad = M
    else:
        # Rare ragged-lane path: pad the element axis up to a lane multiple.
        # (Costs one extra HBM round trip; feature maps with C*H*W % 128 == 0
        #  take the zero-copy path above.)
        rows = -(-M // LANES)
        M_pad = rows * LANES
        x_flat = x.reshape(B, T, M)
        x_flat = jnp.pad(x_flat, ((0, 0), (0, 0), (0, M_pad - M)))
        x_tiled = x_flat.reshape(B, T, rows, LANES)
        lane_padded = True

    # ---- Generation-aware block sizing (kernel is pure HBM-BW-bound).
    try:
        vmem_cap = int(pltpu.get_tpu_info().vmem_capacity_bytes)
        if vmem_cap < (32 << 20):
            vmem_cap = 64 << 20
    except Exception:
        vmem_cap = 64 << 20  # conservative (v7x-sized) fallback

    target_in_block = vmem_cap // 8            # ~16 MiB v5e/v6e, ~8 MiB v7x
    rb_cap = 8192 if vmem_cap >= (96 << 20) else 4096
    max_rb = target_in_block // (T * LANES * itemsize)
    max_rb = max(CHUNK_ROWS, min(rb_cap, (max_rb // CHUNK_ROWS) * CHUNK_ROWS))

    if rows <= max_rb:
        rb = rows                 # full-extent block: exempt from sublane rule
        n_row_blocks = 1
        if B == 1 and rows >= 2 * SUBLANES:
            # Guarantee >=2 parallel grid steps (v7x has 2 TensorCores); the
            # extra grid step is negligible on single-TC v5e/v6e.
            half = -(-rows // 2)
            rb = -(-half // SUBLANES) * SUBLANES
            n_row_blocks = -(-rows // rb)
    else:
        rb = max_rb
        n_row_blocks = -(-rows // rb)
        # Last block may be partial: OOB reads are unspecified and their
        # results are discarded on the masked write -- safe (elementwise op).

    # ---- VMEM budget: double-buffered in + out blocks, plus margin.
    in_block_bytes = T * rb * LANES * itemsize
    out_block_bytes = T * rb * LANES * jnp.dtype(out_dtype).itemsize
    vmem_limit = 2 * (in_block_bytes + out_block_bytes) + (4 << 20)
    vmem_limit = int(min(max(vmem_limit, 16 << 20), (vmem_cap * 3) // 4))

    thr_arr = jnp.reshape(jnp.asarray(act_alpha, jnp.float32), (1, 1))
    kernel = functools.partial(_if_act_kernel, chunk_rows=CHUNK_ROWS)

    out = pl.pallas_call(
        kernel,
        out_shape=jax.ShapeDtypeStruct((B, T, rows, LANES), out_dtype),
        grid=(B, n_row_blocks),
        in_specs=[
            pl.BlockSpec(memory_space=pltpu.MemorySpace.SMEM),  # threshold
            pl.BlockSpec((None, T, rb, LANES), lambda b, r: (b, 0, r, 0)),
        ],
        out_specs=pl.BlockSpec((None, T, rb, LANES), lambda b, r: (b, 0, r, 0)),
        compiler_params=pltpu.CompilerParams(
            dimension_semantics=("parallel", "parallel"),
            vmem_limit_bytes=vmem_limit,
        ),
    )(thr_arr, x_tiled)

    if lane_padded:
        out = out.reshape(B, T, M_pad)[:, :, :M]
    return out.reshape((B, T) + rest)


def _if_act_ref(x, act_alpha):
    """Pure-JAX reference mirroring the PyTorch forward, for sanity checking."""
    x = jnp.asarray(x, jnp.float32)
    T = x.shape[1]
    threshold = jnp.float32(act_alpha)
    membrane = jnp.full(x[:, 0].shape, 0.5, jnp.float32) * threshold
    sum_spikes = jnp.zeros_like(membrane)
    outs = []
    for dt in range(T):
        membrane = membrane + x[:, dt]
        spikes_b = membrane >= threshold
        membrane = jnp.where(spikes_b, membrane - threshold, membrane)
        spikes = spikes_b.astype(jnp.float32)
        sum_spikes = sum_spikes + spikes
        inhibit_b = (membrane <= -0.001) & (sum_spikes > 0.0)
        membrane = jnp.where(inhibit_b, membrane + threshold, membrane)
        inhibit = inhibit_b.astype(jnp.float32)
        sum_spikes = sum_spikes - inhibit
        outs.append(spikes - inhibit)
    return jnp.stack(outs, axis=1) * threshold


if __name__ == "__main__":
    act_alpha = 1.0  # matches IF_act.__init__ (nn.Parameter(1.0))

    cases = [
        (2, 3, 4, 16, 16),   # M=1024: zero-copy path, B=2
        (2, 3, 4, 15, 15),   # M=900:  ragged-lane (padded) path
        (1, 3, 12, 16, 16),  # M=3072, B=1: forced 2-way row split, partial last block
        (1, 4, 4, 20, 20),   # M=1600, T=4: full-extent block, rows not a multiple of 8
    ]
    keys = jax.random.split(jax.random.PRNGKey(0), len(cases))
    for shape, key in zip(cases, keys):
        x = jax.random.normal(key, shape, dtype=jnp.float32) * 1.5
        out = jax.block_until_ready(if_act(x, act_alpha))
        ref = _if_act_ref(x, act_alpha)
        assert out.shape == x.shape, (out.shape, x.shape)
        assert out.dtype == x.dtype
        assert jnp.allclose(out, ref, atol=1e-6), f"mismatch vs reference for {shape}"

    print("KERNEL_OK")
</pallas_src>

<mosaic_0001>
module attributes {stable_mosaic.version = 11 : i64} {
  func.func @_if_act_kernel(%arg0: i32, %arg1: i32, %arg2: memref<1x1xf32, #tpu.memory_space<smem>>, %arg3: memref<1x3x8x128xf32, #tpu.memory_space<vmem>>, %arg4: memref<1x3x8x128xf32, #tpu.memory_space<vmem>>) attributes {dimension_semantics = [#tpu.dimension_semantics<parallel>, #tpu.dimension_semantics<parallel>], iteration_bounds = array<i64: 2, 1>, scalar_prefetch = 0 : i64, scratch_operands = 0 : i64, tpu.core_type = #tpu.core_type<tc>, window_params = [{transform_indices = @transform_0, window_bounds = array<i64: 1, 1>}, {transform_indices = @transform_1, window_bounds = array<i64: 1, 3, 8, 128>}, {transform_indices = @transform_2, window_bounds = array<i64: 1, 3, 8, 128>}]} {
    %c0 = arith.constant 0 : index
    %c0_0 = arith.constant 0 : index
    %0 = memref.load %arg2[%c0, %c0_0] : memref<1x1xf32, #tpu.memory_space<smem>>
    %cst = arith.constant 5.000000e-01 : f32
    %1 = arith.mulf %0, %cst : f32
    %2 = vector.broadcast %1 : f32 to vector<8x128xf32>
    %cst_1 = arith.constant 0.000000e+00 : f32
    %3 = vector.broadcast %cst_1 : f32 to vector<8x128xf32>
    %c0_2 = arith.constant 0 : index
    %c0_3 = arith.constant 0 : index
    %c0_4 = arith.constant 0 : index
    %c0_5 = arith.constant 0 : index
    %4 = vector.load %arg3[%c0_2, %c0_3, %c0_4, %c0_5] : memref<1x3x8x128xf32, #tpu.memory_space<vmem>>, vector<1x1x8x128xf32>
    %5 = vector.shape_cast %4 : vector<1x1x8x128xf32> to vector<8x128xf32>
    %6 = arith.addf %2, %5 : vector<8x128xf32>
    %7 = vector.broadcast %0 : f32 to vector<8x128xf32>
    %8 = arith.cmpf oge, %6, %7 : vector<8x128xf32>
    %9 = vector.broadcast %0 : f32 to vector<8x128xf32>
    %10 = arith.subf %6, %9 : vector<8x128xf32>
    %11 = arith.select %8, %10, %6 : vector<8x128xi1>, vector<8x128xf32>
    %cst_6 = arith.constant 1.000000e+00 : f32
    %12 = vector.broadcast %cst_6 : f32 to vector<8x128xf32>
    %13 = arith.addf %3, %12 : vector<8x128xf32>
    %14 = arith.select %8, %13, %3 : vector<8x128xi1>, vector<8x128xf32>
    %cst_7 = arith.constant -1.000000e-03 : f32
    %15 = vector.broadcast %cst_7 : f32 to vector<8x128xf32>
    %16 = arith.cmpf ole, %11, %15 : vector<8x128xf32>
    %cst_8 = arith.constant 0.000000e+00 : f32
    %17 = vector.broadcast %cst_8 : f32 to vector<8x128xf32>
    %18 = arith.cmpf ogt, %14, %17 : vector<8x128xf32>
    %19 = arith.andi %16, %18 : vector<8x128xi1>
    %20 = vector.broadcast %0 : f32 to vector<8x128xf32>
    %21 = arith.addf %11, %20 : vector<8x128xf32>
    %22 = arith.select %19, %21, %11 : vector<8x128xi1>, vector<8x128xf32>
    %cst_9 = arith.constant 1.000000e+00 : f32
    %23 = vector.broadcast %cst_9 : f32 to vector<8x128xf32>
    %24 = arith.subf %14, %23 : vector<8x128xf32>
    %25 = arith.select %19, %24, %14 : vector<8x128xi1>, vector<8x128xf32>
    %cst_10 = arith.constant 0.000000e+00 : f32
    %26 = arith.subf %cst_10, %0 : f32
    %cst_11 = arith.constant 0.000000e+00 : f32
    %27 = vector.broadcast %26 : f32 to vector<8x128xf32>
    %28 = vector.broadcast %cst_11 : f32 to vector<8x128xf32>
    %29 = arith.select %19, %27, %28 : vector<8x128xi1>, vector<8x128xf32>
    %30 = vector.broadcast %0 : f32 to vector<8x128xf32>
    %31 = arith.select %8, %30, %29 : vector<8x128xi1>, vector<8x128xf32>
    %c0_12 = arith.constant 0 : index
    %c0_13 = arith.constant 0 : index
    %c0_14 = arith.constant 0 : index
    %c0_15 = arith.constant 0 : index
    %32 = vector.load %arg4[%c0_12, %c0_13, %c0_14, %c0_15] : memref<1x3x8x128xf32, #tpu.memory_space<vmem>>, vector<1x1x8x128xf32>
    %33 = vector.shape_cast %32 : vector<1x1x8x128xf32> to vector<8x128xf32>
    %34 = vector.shape_cast %31 : vector<8x128xf32> to vector<1x1x8x128xf32>
    tpu.vector_store %arg4[%c0_12, %c0_13, %c0_14, %c0_15], %34 {strides = array<i32>} : memref<1x3x8x128xf32, #tpu.memory_space<vmem>>, vector<1x1x8x128xf32>,
    %c0_16 = arith.constant 0 : index
    %c1 = arith.constant 1 : index
    %c0_17 = arith.constant 0 : index
    %c0_18 = arith.constant 0 : index
    %35 = vector.load %arg3[%c0_16, %c1, %c0_17, %c0_18] : memref<1x3x8x128xf32, #tpu.memory_space<vmem>>, vector<1x1x8x128xf32>
    %36 = vector.shape_cast %35 : vector<1x1x8x128xf32> to vector<8x128xf32>
    %37 = arith.addf %22, %36 : vector<8x128xf32>
    %38 = vector.broadcast %0 : f32 to vector<8x128xf32>
    %39 = arith.cmpf oge, %37, %38 : vector<8x128xf32>
    %40 = vector.broadcast %0 : f32 to vector<8x128xf32>
    %41 = arith.subf %37, %40 : vector<8x128xf32>
    %42 = arith.select %39, %41, %37 : vector<8x128xi1>, vector<8x128xf32>
    %cst_19 = arith.constant 1.000000e+00 : f32
    %43 = vector.broadcast %cst_19 : f32 to vector<8x128xf32>
    %44 = arith.addf %25, %43 : vector<8x128xf32>
    %45 = arith.select %39, %44, %25 : vector<8x128xi1>, vector<8x128xf32>
    %cst_20 = arith.constant -1.000000e-03 : f32
    %46 = vector.broadcast %cst_20 : f32 to vector<8x128xf32>
    %47 = arith.cmpf ole, %42, %46 : vector<8x128xf32>
    %cst_21 = arith.constant 0.000000e+00 : f32
    %48 = vector.broadcast %cst_21 : f32 to vector<8x128xf32>
    %49 = arith.cmpf ogt, %45, %48 : vector<8x128xf32>
    %50 = arith.andi %47, %49 : vector<8x128xi1>
    %51 = vector.broadcast %0 : f32 to vector<8x128xf32>
    %52 = arith.addf %42, %51 : vector<8x128xf32>
    %53 = arith.select %50, %52, %42 : vector<8x128xi1>, vector<8x128xf32>
    %cst_22 = arith.constant 1.000000e+00 : f32
    %54 = vector.broadcast %cst_22 : f32 to vector<8x128xf32>
    %55 = arith.subf %45, %54 : vector<8x128xf32>
    %56 = arith.select %50, %55, %45 : vector<8x128xi1>, vector<8x128xf32>
    %cst_23 = arith.constant 0.000000e+00 : f32
    %57 = arith.subf %cst_23, %0 : f32
    %cst_24 = arith.constant 0.000000e+00 : f32
    %58 = vector.broadcast %57 : f32 to vector<8x128xf32>
    %59 = vector.broadcast %cst_24 : f32 to vector<8x128xf32>
    %60 = arith.select %50, %58, %59 : vector<8x128xi1>, vector<8x128xf32>
    %61 = vector.broadcast %0 : f32 to vector<8x128xf32>
    %62 = arith.select %39, %61, %60 : vector<8x128xi1>, vector<8x128xf32>
    %c0_25 = arith.constant 0 : index
    %c1_26 = arith.constant 1 : index
    %c0_27 = arith.constant 0 : index
    %c0_28 = arith.constant 0 : index
    %63 = vector.load %arg4[%c0_25, %c1_26, %c0_27, %c0_28] : memref<1x3x8x128xf32, #tpu.memory_space<vmem>>, vector<1x1x8x128xf32>
    %64 = vector.shape_cast %63 : vector<1x1x8x128xf32> to vector<8x128xf32>
    %65 = vector.shape_cast %62 : vector<8x128xf32> to vector<1x1x8x128xf32>
    tpu.vector_store %arg4[%c0_25, %c1_26, %c0_27, %c0_28], %65 {strides = array<i32>} : memref<1x3x8x128xf32, #tpu.memory_space<vmem>>, vector<1x1x8x128xf32>,
    %c0_29 = arith.constant 0 : index
    %c2 = arith.constant 2 : index
    %c0_30 = arith.constant 0 : index
    %c0_31 = arith.constant 0 : index
    %66 = vector.load %arg3[%c0_29, %c2, %c0_30, %c0_31] : memref<1x3x8x128xf32, #tpu.memory_space<vmem>>, vector<1x1x8x128xf32>
    %67 = vector.shape_cast %66 : vector<1x1x8x128xf32> to vector<8x128xf32>
    %68 = arith.addf %53, %67 : vector<8x128xf32>
    %69 = vector.broadcast %0 : f32 to vector<8x128xf32>
    %70 = arith.cmpf oge, %68, %69 : vector<8x128xf32>
    %71 = vector.broadcast %0 : f32 to vector<8x128xf32>
    %72 = arith.subf %68, %71 : vector<8x128xf32>
    %73 = arith.select %70, %72, %68 : vector<8x128xi1>, vector<8x128xf32>
    %cst_32 = arith.constant 1.000000e+00 : f32
    %74 = vector.broadcast %cst_32 : f32 to vector<8x128xf32>
    %75 = arith.addf %56, %74 : vector<8x128xf32>
    %76 = arith.select %70, %75, %56 : vector<8x128xi1>, vector<8x128xf32>
    %cst_33 = arith.constant -1.000000e-03 : f32
    %77 = vector.broadcast %cst_33 : f32 to vector<8x128xf32>
    %78 = arith.cmpf ole, %73, %77 : vector<8x128xf32>
    %cst_34 = arith.constant 0.000000e+00 : f32
    %79 = vector.broadcast %cst_34 : f32 to vector<8x128xf32>
    %80 = arith.cmpf ogt, %76, %79 : vector<8x128xf32>
    %81 = arith.andi %78, %80 : vector<8x128xi1>
    %cst_35 = arith.constant 0.000000e+00 : f32
    %82 = arith.subf %cst_35, %0 : f32
    %cst_36 = arith.constant 0.000000e+00 : f32
    %83 = vector.broadcast %82 : f32 to vector<8x128xf32>
    %84 = vector.broadcast %cst_36 : f32 to vector<8x128xf32>
    %85 = arith.select %81, %83, %84 : vector<8x128xi1>, vector<8x128xf32>
    %86 = vector.broadcast %0 : f32 to vector<8x128xf32>
    %87 = arith.select %70, %86, %85 : vector<8x128xi1>, vector<8x128xf32>
    %c0_37 = arith.constant 0 : index
    %c2_38 = arith.constant 2 : index
    %c0_39 = arith.constant 0 : index
    %c0_40 = arith.constant 0 : index
    %88 = vector.load %arg4[%c0_37, %c2_38, %c0_39, %c0_40] : memref<1x3x8x128xf32, #tpu.memory_space<vmem>>, vector<1x1x8x128xf32>
    %89 = vector.shape_cast %88 : vector<1x1x8x128xf32> to vector<8x128xf32>
    %90 = vector.shape_cast %87 : vector<8x128xf32> to vector<1x1x8x128xf32>
    tpu.vector_store %arg4[%c0_37, %c2_38, %c0_39, %c0_40], %90 {strides = array<i32>} : memref<1x3x8x128xf32, #tpu.memory_space<vmem>>, vector<1x1x8x128xf32>,
    return
  }
  func.func @transform_0(%arg0: i32, %arg1: i32) -> (i32, i32) {
    %c0_i32 = arith.constant 0 : i32
    %c0_i32_0 = arith.constant 0 : i32
    %c0_i32_1 = arith.constant 0 : i32
    return %c0_i32, %c0_i32_0 : i32, i32
  }
  func.func @transform_1(%arg0: i32, %arg1: i32) -> (i32, i32, i32, i32) {
    %c0_i32 = arith.constant 0 : i32
    %c0_i32_0 = arith.constant 0 : i32
    %c0_i32_1 = arith.constant 0 : i32
    return %arg0, %c0_i32, %arg1, %c0_i32_0 : i32, i32, i32, i32
  }
  func.func @transform_2(%arg0: i32, %arg1: i32) -> (i32, i32, i32, i32) {
    %c0_i32 = arith.constant 0 : i32
    %c0_i32_0 = arith.constant 0 : i32
    %c0_i32_1 = arith.constant 0 : i32
    return %arg0, %c0_i32, %arg1, %c0_i32_0 : i32, i32, i32, i32
  }
}

</mosaic_0001>

<llo_original>
// kernel: tpu_custom_call.1
$region0: #{tpu_custom_call.1}
  #allocation0 [shape = 'u32[]', space=smem, size = 0x4, offset = 0x4, fixed_abs, tag = 'smem constant byte address 0x4 - core index']
  #allocation1 [shape = 'u32[144,128]{1,0:T(1,128)}', space=vmem, size = 0x12000, scoped, tag = 'internal scratch']
  #allocation2 [shape = 'f32[1,1]{1,0:T(1,128)S(6)}', space=smem, size = 0x200, scoped, tag = 'scoped memory for tpu_custom_call.1']
  %s0 = inlined_call_operand.<no memory space> [shape: f32[1,1], index: 0, kind: input, shape index: {}]
  %s1 = inlined_call_operand.hbm [shape: f32[2,3,8,128], index: 1, kind: input, shape index: {}]
  %s2 = inlined_call_operand.hbm [shape: f32[2,3,8,128], index: 2, kind: output, shape index: {}]
  %s3 = sld [smem:[#allocation0]]
  $region45: #{tpu_custom_call.1} parent=0
    _
  %s5 = ssub.s32 1, %s3
  %s6 = scalar_select 0, %s5, %s3
  %7 = sst [smem:[#allocation2]] %s0
  $region1: #{tpu_custom_call.1} parent=0
    #allocation3 [shape = 'u8[24576]{0}', space=vmem, size = 0x6000, scoped, tag = 'input window, operand 1']
    #allocation4 [shape = 's32[2]{0}', space=sflag, size = 0x8, scoped, tag = 'scoped memory for tpu_custom_call.1']
    #allocation5 [shape = 's32[2]{0}', space=sflag, size = 0x8, scoped, tag = 'scoped memory for tpu_custom_call.1']
    #allocation6 [shape = 'u8[24576]{0}', space=vmem, size = 0x6000, scoped, tag = 'output window, operand 0']
    %8 = vsyncpa [#allocation4], 0
    %s9 = scalar_lea.sflag [#allocation4], 1
    %10 = vsyncpa %s9, 0
    %11 = vsyncpa [#allocation5], 0
    %s12 = scalar_lea.sflag [#allocation5], 1
    %13 = vsyncpa %s12, 0
    loop: start=0, step=1, limit=4
    $region2: #{tpu_custom_call.1} parent=1 // loop_pre_header
      _
    $region3: #{tpu_custom_call.1} parent=1 // loop_header
      %s15 = sphi 0, %s19
      %p16 = scmp.ge.s32.totalorder %s15, 4
      %s22 = sphi 0, %s34
      %s23 = sphi 0, %s30
      %s24 = sphi 0, %s22
      %s25 = sphi 0, %s23
      %s26 = sphi 0, %s24
      %s27 = sphi 0, %s25
      %s35 = sphi 0, %s35
      %s37 = sphi 0, %s35
      %s38 = sphi 0, %s37
      %s52 = sphi 0, %s38
      %s60 = sphi 0, %s62
      %s63 = sphi 0, %s60
      %s64 = sphi 0, %s63
      %s80 = sphi 0, %s64
      %s88 = sphi 0, %s90
      %s91 = sphi 0, %s88
      %s92 = sphi 0, %s91
      %s108 = sphi 0, %s92
    $region4: #{tpu_custom_call.1} parent=1 // loop_header_branch
      %18 = sbr.rel (%p16) target = $region8
    $region5: #{tpu_custom_call.1} parent=1 // loop_body
      %s20 = ssub.s32 %s15, 1
      %s21 = ssub.s32 %s15, 2
      %s28 = sadd.s32 1, %s23
      %p29 = scmp.ge.s32.totalorder %s28, 1
      %s30 = scalar_select %p29, 0, %s28
      %s31 = sadd.s32 1, %s22
      %s32 = scalar_select %p29, %s31, %s22
      %p33 = scmp.ge.s32.totalorder %s32, 2
      %s34 = scalar_select %p33, 0, %s32
      %s36 = sadd.s32 %s35, 1
      %p39 = scmp.eq.s32.totalorder %s15, 1
      %p40 = scmp.ne.s32.totalorder %s35, %s37
      %p41 = scmp.eq.s32.totalorder %s15, 0
      %p42 = por %p40, %p41
      %p43 = scmp.ne.s32.totalorder %s35, %s37
      %p44 = scmp.eq.s32.totalorder %s20, 1
      %p45 = por %p43, %p44
      %p46 = scmp.ne.s32.totalorder %s37, %s38
      %p47 = scmp.eq.s32.totalorder %s20, 0
      %p48 = por %p46, %p47
      %p49 = scmp.ne.s32.totalorder %s37, %s38
      %p50 = scmp.eq.s32.totalorder %s21, 1
      %p51 = por %p49, %p50
      %p53 = scmp.ne.s32.totalorder %s38, %s52
      %p54 = scmp.eq.s32.totalorder %s21, 0
      %p55 = por %p53, %p54
      %s56 = ssub.s32 %s22, %s34
      %s57 = ssub.s32 %s23, %s30
      %s58 = sor.u32 %s56, %s57
      %p59 = scmp.eq.s32.totalorder %s58, 0
      %s61 = sadd.s32 %s60, 1
      %s62 = scalar_select %p59, %s60, %s61
      %p65 = pneg %p59
      %p66 = scmp.eq.s32.totalorder %s15, 1
      %p67 = por %p65, %p66
      %p68 = scmp.ne.s32.totalorder %s60, %s63
      %p69 = scmp.eq.s32.totalorder %s15, 0
      %p70 = por %p68, %p69
      %p71 = scmp.ne.s32.totalorder %s60, %s63
      %p72 = scmp.eq.s32.totalorder %s20, 1
      %p73 = por %p71, %p72
      %p74 = scmp.ne.s32.totalorder %s63, %s64
      %p75 = scmp.eq.s32.totalorder %s20, 0
      %p76 = por %p74, %p75
      %p77 = scmp.ne.s32.totalorder %s63, %s64
      %p78 = scmp.eq.s32.totalorder %s21, 1
      %p79 = por %p77, %p78
      %p81 = scmp.ne.s32.totalorder %s64, %s80
      %p82 = scmp.eq.s32.totalorder %s21, 0
      %p83 = por %p81, %p82
      %s84 = ssub.s32 %s22, %s34
      %s85 = ssub.s32 %s23, %s30
      %s86 = sor.u32 %s84, %s85
      %p87 = scmp.eq.s32.totalorder %s86, 0
      %s89 = sadd.s32 %s88, 1
      %s90 = scalar_select %p87, %s88, %s89
      %p93 = pneg %p87
      %p94 = scmp.eq.s32.totalorder %s15, 1
      %p95 = por %p93, %p94
      %p96 = scmp.ne.s32.totalorder %s88, %s91
      %p97 = scmp.eq.s32.totalorder %s15, 0
      %p98 = por %p96, %p97
      %p99 = scmp.ne.s32.totalorder %s88, %s91
      %p100 = scmp.eq.s32.totalorder %s20, 1
      %p101 = por %p99, %p100
      %p102 = scmp.ne.s32.totalorder %s91, %s92
      %p103 = scmp.eq.s32.totalorder %s20, 0
      %p104 = por %p102, %p103
      %p105 = scmp.ne.s32.totalorder %s91, %s92
      %p106 = scmp.eq.s32.totalorder %s21, 1
      %p107 = por %p105, %p106
      %p109 = scmp.ne.s32.totalorder %s92, %s108
      %p110 = scmp.eq.s32.totalorder %s21, 0
      %p111 = por %p109, %p110
      %p112 = scmp.le.s32.totalorder 1, %s15
      %p113 = scmp.lt.s32.totalorder %s15, 3
      %p114 = pnand %p112, %p113
      %p115 = pneg %p114
      // Predicated region
      $region9: #{tpu_custom_call.1} parent=5 // pred_check
        _
      $region10: #{tpu_custom_call.1} parent=5 // pred_check_branch
        %117 = sbr.rel (%p114) target = $region12
      $region11: #{tpu_custom_call.1} parent=5 // pred_region
        %s118 = ssub.s32 %s15, 1
        // Predicated region
        $region13: #{tpu_custom_call.1} parent=11 // pred_check
          %p119 = pneg %p48
        $region14: #{tpu_custom_call.1} parent=11 // pred_check_branch
          %121 = sbr.rel (%p119) target = $region16
        $region15: #{tpu_custom_call.1} parent=11 // pred_region
          _
        $region16: #{tpu_custom_call.1} parent=11 // pred_fallthru
          _
      $region12: #{tpu_custom_call.1} parent=5 // pred_fallthru
        _
      %p122 = scmp.lt.s32.totalorder %s15, 2
      // Predicated region
      $region17: #{tpu_custom_call.1} parent=5 // pred_check
        %p123 = pneg %p122
      $region18: #{tpu_custom_call.1} parent=5 // pred_check_branch
        %125 = sbr.rel (%p123) target = $region20
      $region19: #{tpu_custom_call.1} parent=5 // pred_region
        // Predicated region
        $region21: #{tpu_custom_call.1} parent=19 // pred_check
          %p126 = pneg %p70
        $region22: #{tpu_custom_call.1} parent=19 // pred_check_branch
          %128 = sbr.rel (%p126) target = $region24
        $region23: #{tpu_custom_call.1} parent=19 // pred_region
          %s129 = sand.u32 %s60, 1
          %s130 = scalar_lea.sflag [#allocation4], %s129
          %s131 = sand.u32 %s60, 1
          %s132 = smul.addr %s131, 24
          %s133 = scalar_lea.vmem [#allocation3], %s132
          %s135 = ssub.s32 384, 384
          %136 = vsyncadd %s130, %s135
          %s137 = smul.addr %s22, 3
          %s138 = sadd.s32 %s23, %s137
          %s139 = smul.addr %s138, 128
          %s140 = scalar_lea.hbm %s1, %s139
          %s141 = sshll.u32 %s133, 4
          %s142 = int_to_ptr.vmem [resolvable:$true] %s141
          %147 = dma.hbm_to_vmem [thread:$0]  %s140, 384, %s142, %s130, 128, 128, 8
        $region24: #{tpu_custom_call.1} parent=19 // pred_fallthru
          _
      $region20: #{tpu_custom_call.1} parent=5 // pred_fallthru
        _
      %p148 = scmp.le.s32.totalorder 1, %s15
      %p149 = scmp.lt.s32.totalorder %s15, 3
      %p150 = pnand %p148, %p149
      %p151 = pneg %p150
      // Predicated region
      $region25: #{tpu_custom_call.1} parent=5 // pred_check
        _
      $region26: #{tpu_custom_call.1} parent=5 // pred_check_branch
        %153 = sbr.rel (%p150) target = $region28
      $region27: #{tpu_custom_call.1} parent=5 // pred_region
        %s154 = ssub.s32 %s15, 1
        %s155 = sand.u32 %s63, 1
        %s156 = scalar_lea.sflag [#allocation4], %s155
        %s157 = sand.u32 %s63, 1
        %s158 = smul.addr %s157, 24
        %s159 = scalar_lea.vmem [#allocation3], %s158
        // Predicated region
        $region29: #{tpu_custom_call.1} parent=27 // pred_check
          %p160 = pneg %p76
        $region30: #{tpu_custom_call.1} parent=27 // pred_check_branch
          %162 = sbr.rel (%p160) target = $region32
        $region31: #{tpu_custom_call.1} parent=27 // pred_region
          %163 = dma.done %s156, 384
        $region32: #{tpu_custom_call.1} parent=27 // pred_fallthru
          _
        %p164 = pneg %p48
        %p165 = pneg %p45
        %s166 = sand.u32 %s63, 1
        %s167 = scalar_lea.sflag [#allocation4], %s166
        %s168 = sand.u32 %s63, 1
        %s169 = smul.addr %s168, 24
        %s170 = scalar_lea.vmem [#allocation3], %s169
        %p171 = pneg %p76
        %p172 = pneg %p73
        %p173 = pneg %p104
        %p174 = pneg %p101
        %s175 = sand.u32 %s91, 1
        %s176 = scalar_lea.sflag [#allocation5], %s175
        %s177 = sand.u32 %s91, 1
        %s178 = smul.addr %s177, 24
        %s179 = scalar_lea.vmem [#allocation6], %s178
        %s180 = sld [smem:[#allocation2]]
        %s181 = smul.f32 %s180, 0.5
        %v182 = vstv %s181
        %v183 = vld [vmem:[%s159] sm:$0xff]
        %v184 = vadd.f32 %v182, %v183
        %v185 = vstv %s180
        %vm186 = vcmp.ge.f32.partialorder %v184, %v185
        %v187 = vsub.f32 %v184, %v185
        %v188 = vsel %vm186, %v187, %v184
        %v189 = vsel %vm186, 1.0, 0.0
        %vm190 = vcmp.le.f32.partialorder %v188, -0.001
        %vm191 = vcmp.gt.f32.partialorder %v189, 0.0
        %vm192 = vmand %vm190, %vm191
        %v193 = vadd.f32 %v188, %v185
        %v194 = vsel %vm192, %v193, %v188
        %v195 = vsub.f32 %v189, 1.0
        %v196 = vsel %vm192, %v195, %v189
        %s197 = ssub.f32 0.0, %s180
        %v198 = vstv %s197
        %v199 = vsel %vm192, %v198, 0.0
        %v200 = vsel %vm186, %v185, %v199
        %201 = vst [vmem:[%s179] sm:$0xff] %v200
        %s202 = scalar_lea.vmem %s159, 8 [#allocation3]
        %v203 = vld [vmem:[%s202] sm:$0xff]
        %v204 = vadd.f32 %v194, %v203
        %vm205 = vcmp.ge.f32.partialorder %v204, %v185
        %v206 = vsub.f32 %v204, %v185
        %v207 = vsel %vm205, %v206, %v204
        %v208 = vadd.f32 %v196, 1.0
        %v209 = vsel %vm205, %v208, %v196
        %vm210 = vcmp.le.f32.partialorder %v207, -0.001
        %vm211 = vcmp.gt.f32.partialorder %v209, 0.0
        %vm212 = vmand %vm210, %vm211
        %v213 = vadd.f32 %v207, %v185
        %v214 = vsel %vm212, %v213, %v207
        %v215 = vsub.f32 %v209, 1.0
        %v216 = vsel %vm212, %v215, %v209
        %v217 = vsel %vm212, %v198, 0.0
        %v218 = vsel %vm205, %v185, %v217
        %s219 = scalar_lea.vmem %s179, 8 [#allocation6]
        %220 = vst [vmem:[%s219] sm:$0xff] %v218
        %s221 = scalar_lea.vmem %s159, 16 [#allocation3]
        %v222 = vld [vmem:[%s221] sm:$0xff]
        %v223 = vadd.f32 %v214, %v222
        %vm224 = vcmp.ge.f32.partialorder %v223, %v185
        %v225 = vsub.f32 %v223, %v185
        %v226 = vsel %vm224, %v225, %v223
        %v227 = vadd.f32 %v216, 1.0
        %v228 = vsel %vm224, %v227, %v216
        %vm229 = vcmp.le.f32.partialorder %v226, -0.001
        %vm230 = vcmp.gt.f32.partialorder %v228, 0.0
        %vm231 = vmand %vm229, %vm230
        %v232 = vsel %vm231, %v198, 0.0
        %v233 = vsel %vm224, %v185, %v232
        %s234 = scalar_lea.vmem %s179, 16 [#allocation6]
        %235 = vst [vmem:[%s234] sm:$0xff] %v233
        %s236 = sand.u32 %s91, 1
        %s237 = scalar_lea.sflag [#allocation5], %s236
        %s238 = sand.u32 %s91, 1
        %s239 = smul.addr %s238, 24
        %s240 = scalar_lea.vmem [#allocation6], %s239
        // Predicated region
        $region33: #{tpu_custom_call.1} parent=27 // pred_check
          %p241 = pneg %p101
        $region34: #{tpu_custom_call.1} parent=27 // pred_check_branch
          %243 = sbr.rel (%p241) target = $region36
        $region35: #{tpu_custom_call.1} parent=27 // pred_region
          %s245 = ssub.s32 384, 384
          %246 = vsyncadd %s237, %s245
          %s247 = smul.addr %s24, 3
          %s248 = sadd.s32 %s25, %s247
          %s249 = smul.addr %s248, 128
          %s250 = scalar_lea.hbm %s2, %s249
          %s251 = sshll.u32 %s240, 4
          %s252 = int_to_ptr.vmem [resolvable:$true] %s251
          %257 = dma.vmem_to_hbm [thread:$0]  %s252, 384, %s250, %s237, 128, 128, 8
        $region36: #{tpu_custom_call.1} parent=27 // pred_fallthru
          _
      $region28: #{tpu_custom_call.1} parent=5 // pred_fallthru
        _
      %p258 = scmp.le.s32.totalorder 2, %s15
      // Predicated region
      $region37: #{tpu_custom_call.1} parent=5 // pred_check
        %p259 = pneg %p258
      $region38: #{tpu_custom_call.1} parent=5 // pred_check_branch
        %261 = sbr.rel (%p259) target = $region40
      $region39: #{tpu_custom_call.1} parent=5 // pred_region
        %s262 = ssub.s32 %s15, 2
        // Predicated region
        $region41: #{tpu_custom_call.1} parent=39 // pred_check
          %p263 = pneg %p107
        $region42: #{tpu_custom_call.1} parent=39 // pred_check_branch
          %265 = sbr.rel (%p263) target = $region44
        $region43: #{tpu_custom_call.1} parent=39 // pred_region
          %s266 = sand.u32 %s92, 1
          %s267 = scalar_lea.sflag [#allocation5], %s266
          %s268 = sand.u32 %s92, 1
          %s269 = smul.addr %s268, 24
          %s270 = scalar_lea.vmem [#allocation6], %s269
          %271 = dma.done %s267, 384
        $region44: #{tpu_custom_call.1} parent=39 // pred_fallthru
          _
      $region40: #{tpu_custom_call.1} parent=5 // pred_fallthru
        _
    $region6: #{tpu_custom_call.1} parent=1 // loop_footer
      %s19 = sadd.s32 1, %s15
    $region7: #{tpu_custom_call.1} parent=1 // loop_footer_branch
      %14 = sbr.rel target = $region3
    $region8: #{tpu_custom_call.1} parent=1 // loop_exit
      _
    %272 = vsyncpa [#allocation4], 1
    %s273 = scalar_lea.sflag [#allocation4], 1
    %274 = vsyncpa %s273, 1
    %275 = vsyncpa [#allocation5], 1
    %s276 = scalar_lea.sflag [#allocation5], 1
    %277 = vsyncpa %s276, 1

</llo_original>
